<compile_context>
chip_gen: v6e
topology: v6e:2x2x1
jax: 0.10.0
libtpu: 0.0.40
codegen_flags: <defaults>
</compile_context>

<pallas_src>
import functools

import jax
import jax.numpy as jnp
from jax.experimental import pallas as pl
from jax.experimental.pallas import tpu as pltpu

DEFAULT_TEMPERATURE = 4.0


def _attention_kernel(q_ref, ctx_ref, wctx_ref, amap_ref, *, temperature):
    # q_ref:    (Bt, Q, E)   ctx_ref:  (Bt, E, L)
    # wctx_ref: (Bt, Q, E)   amap_ref: (Bt, Q, L)
    q = q_ref[...]        # native dtype, fed straight to the MXU
    ctx = ctx_ref[...]    # native dtype

    # scores[b, q, l] = sum_e q[b, q, e] * ctx[b, e, l]   (f32 accumulation)
    scores = jnp.einsum(
        "bqe,bel->bql", q, ctx, preferred_element_type=jnp.float32
    )  # (Bt, Q, L) f32

    # Softmax #1 over the query axis (torch: softmax over dim=-1 of (B*L, Q)).
    m0 = jnp.max(scores, axis=1, keepdims=True)           # (Bt, 1, L)
    e0 = jnp.exp(scores - m0)                             # (Bt, Q, L)
    s0 = jnp.sum(e0, axis=1, keepdims=True)               # (Bt, 1, L)
    # Fold temperature into the normalizer (the second softmax only sees
    # temperature * attn_q, so no un-scaled attn_q is ever materialized).
    z = e0 * (temperature * pl.reciprocal(s0, approx=True))   # (Bt, Q, L)

    # Softmax #2 over the context axis (torch: softmax over dim=-1 of (B*Q, L)).
    m1 = jnp.max(z, axis=2, keepdims=True)                 # (Bt, Q, 1)
    e1 = jnp.exp(z - m1)                                   # (Bt, Q, L)
    s1 = jnp.sum(e1, axis=2, keepdims=True)                # (Bt, Q, 1)
    attn_c = e1 * pl.reciprocal(s1, approx=True)           # (Bt, Q, L) f32

    # weighted[b, q, e] = sum_l attn_c[b, q, l] * ctx[b, e, l]
    attn_mm = attn_c if ctx.dtype == jnp.float32 else attn_c.astype(ctx.dtype)
    wctx = jnp.einsum(
        "bql,bel->bqe", attn_mm, ctx, preferred_element_type=jnp.float32
    )  # (Bt, Q, E) f32

    wctx_ref[...] = wctx.astype(wctx_ref.dtype)
    amap_ref[...] = attn_c.astype(amap_ref.dtype)


def _pick_batch_block(batch, per_batch_bytes, vmem_block_budget=12 * 1024 * 1024):
    """Largest divisor of `batch` that fits the VMEM block budget and keeps
    the grid extent >= 2 (so both v7x TensorCores get work)."""
    max_bt = max(1, vmem_block_budget // max(per_batch_bytes, 1))
    if batch >= 2:
        max_bt = min(max_bt, batch // 2)
    bt = 1
    for cand in range(1, batch + 1):
        if batch % cand == 0 and cand <= max_bt:
            bt = cand
    return bt


def attention_module(query, context, temperature=DEFAULT_TEMPERATURE):
    """query: (B, E, Q); context: (B, E, H, W).

    Returns:
      weighted_context: (B, E, Q)
      attention_map:    (B, Q, H, W)
    """
    B, E, Q = query.shape
    H, W = context.shape[2], context.shape[3]
    L = H * W

    # Wrapper-side layout plumbing (free / handled by XLA, outside the kernel):
    ctx_flat = context.reshape(B, E, L)          # (B, E, L), L lane-dense
    q_t = jnp.swapaxes(query, 1, 2)              # (B, Q, E), E lane-dense

    itemsize = jnp.dtype(query.dtype).itemsize
    per_batch_bytes = itemsize * (2 * Q * E + E * L + Q * L)
    bt = _pick_batch_block(B, per_batch_bytes)
    grid = (B // bt,)

    cost = pl.CostEstimate(
        flops=4 * B * E * L * Q,                 # two matmuls per batch element
        transcendentals=2 * B * Q * L,           # two exp passes over (Q, L)
        bytes_accessed=itemsize * (2 * B * E * Q + B * E * L + B * Q * L),
    )

    kernel = functools.partial(_attention_kernel, temperature=float(temperature))

    wctx_qe, amap = pl.pallas_call(
        kernel,
        out_shape=(
            jax.ShapeDtypeStruct((B, Q, E), query.dtype),
            jax.ShapeDtypeStruct((B, Q, L), query.dtype),
        ),
        grid_spec=pltpu.PrefetchScalarGridSpec(
            num_scalar_prefetch=0,
            grid=grid,
            in_specs=[
                pl.BlockSpec((bt, Q, E), lambda b: (b, 0, 0)),
                pl.BlockSpec((bt, E, L), lambda b: (b, 0, 0)),
            ],
            out_specs=[
                pl.BlockSpec((bt, Q, E), lambda b: (b, 0, 0)),
                pl.BlockSpec((bt, Q, L), lambda b: (b, 0, 0)),
            ],
        ),
        compiler_params=pltpu.CompilerParams(
            dimension_semantics=("parallel",),
            vmem_limit_bytes=32 * 1024 * 1024,
        ),
        cost_estimate=cost,
    )(q_t, ctx_flat)

    weighted_context = jnp.swapaxes(wctx_qe, 1, 2)    # back to (B, E, Q)
    attention_map = amap.reshape(B, Q, H, W)
    return weighted_context, attention_map


def attention_ref(query, context, temperature=DEFAULT_TEMPERATURE):
    """Pure-JAX reference mirroring the PyTorch forward pass (high precision)."""
    B, E, Q = query.shape
    H, W = context.shape[2], context.shape[3]
    L = H * W
    ctx = context.reshape(B, E, L).astype(jnp.float32)
    q = query.astype(jnp.float32)

    scores = jnp.einsum("bel,beq->blq", ctx, q,
                        precision=jax.lax.Precision.HIGHEST)      # (B, L, Q)
    attn_q = jax.nn.softmax(scores, axis=-1)                      # over Q
    attn_c = jax.nn.softmax(jnp.swapaxes(attn_q, 1, 2) * temperature,
                            axis=-1)                              # (B, Q, L)
    weighted = jnp.einsum("bel,bql->beq", ctx, attn_c,
                          precision=jax.lax.Precision.HIGHEST)    # (B, E, Q)
    return weighted, attn_c.reshape(B, Q, H, W)


if __name__ == "__main__":
    key = jax.random.PRNGKey(0)
    kq, kc = jax.random.split(key)

    B, E, Q, H, W = 2, 32, 8, 16, 16
    query = jax.random.normal(kq, (B, E, Q), dtype=jnp.float32)
    context = jax.random.normal(kc, (B, E, H, W), dtype=jnp.float32)
    # GLoRIA feeds L2-normalized embeddings; normalizing keeps the demo in the
    # representative regime (cosine-similarity scores in [-1, 1]).
    query = query / jnp.linalg.norm(query, axis=1, keepdims=True)
    context = context / jnp.linalg.norm(context, axis=1, keepdims=True)

    wctx, amap = attention_module(query, context)
    jax.block_until_ready((wctx, amap))

    rw, ra = attention_ref(query, context)
    assert wctx.shape == (B, E, Q), wctx.shape
    assert amap.shape == (B, Q, H, W), amap.shape

    err_w = float(jnp.max(jnp.abs(wctx - rw)))
    err_a = float(jnp.max(jnp.abs(amap - ra)))
    # Tolerances cover single-pass bf16 MXU matmuls (DEFAULT precision) and the
    # approximate EUP reciprocal used for the softmax normalizers.
    assert err_w < 5e-3, err_w
    assert err_a < 5e-3, err_a

    print("KERNEL_OK")
</pallas_src>

<mosaic_0001>
module attributes {stable_mosaic.version = 11 : i64} {
  func.func @_attention_kernel(%arg0: i32, %arg1: memref<1x8x32xf32, #tpu.memory_space<vmem>>, %arg2: memref<1x32x256xf32, #tpu.memory_space<vmem>>, %arg3: memref<1x8x32xf32, #tpu.memory_space<vmem>>, %arg4: memref<1x8x256xf32, #tpu.memory_space<vmem>>) attributes {dimension_semantics = [#tpu.dimension_semantics<parallel>], iteration_bounds = array<i64: 2>, scalar_prefetch = 0 : i64, scratch_operands = 0 : i64, tpu.core_type = #tpu.core_type<tc>, window_params = [{transform_indices = @transform_0, window_bounds = array<i64: 1, 8, 32>}, {transform_indices = @transform_1, window_bounds = array<i64: 1, 32, 256>}, {transform_indices = @transform_2, window_bounds = array<i64: 1, 8, 32>}, {transform_indices = @transform_3, window_bounds = array<i64: 1, 8, 256>}]} {
    %c0 = arith.constant 0 : index
    %c0_0 = arith.constant 0 : index
    %c0_1 = arith.constant 0 : index
    %0 = vector.load %arg1[%c0, %c0_0, %c0_1] : memref<1x8x32xf32, #tpu.memory_space<vmem>>, vector<1x8x32xf32>
    %c0_2 = arith.constant 0 : index
    %c0_3 = arith.constant 0 : index
    %c0_4 = arith.constant 0 : index
    %1 = vector.load %arg2[%c0_2, %c0_3, %c0_4] : memref<1x32x256xf32, #tpu.memory_space<vmem>>, vector<1x32x256xf32>
    "tpu.trace_start"() <{level = 10 : i32, message = "bqe,bel->bql"}> : () -> ()
    %cst = arith.constant dense<0.000000e+00> : vector<1x8x256xf32>
    %2 = tpu.matmul %0, %1, %cst {dimension_numbers = #tpu.dot_dimension_numbers<[2], [1], [1], [2], [0, 0, 0, 1, 1, 2], [0], [0]>} : vector<1x8x32xf32>, vector<1x32x256xf32>, vector<1x8x256xf32> -> vector<1x8x256xf32>
    "tpu.trace_stop"() : () -> ()
    %cst_5 = arith.constant dense<0xFF800000> : vector<1x256xf32>
    %3 = vector.multi_reduction <maximumf>, %2, %cst_5 [1] : vector<1x8x256xf32> to vector<1x256xf32>
    %4 = vector.shape_cast %3 : vector<1x256xf32> to vector<1x1x256xf32>
    %5 = vector.broadcast %4 : vector<1x1x256xf32> to vector<1x8x256xf32>
    %6 = arith.subf %2, %5 : vector<1x8x256xf32>
    %7 = math.exp %6 : vector<1x8x256xf32>
    %cst_6 = arith.constant dense<0.000000e+00> : vector<1x256xf32>
    %8 = vector.multi_reduction <add>, %7, %cst_6 [1] : vector<1x8x256xf32> to vector<1x256xf32>
    %9 = vector.shape_cast %8 : vector<1x256xf32> to vector<1x1x256xf32>
    %10 = tpu.reciprocal %9 {approx = true} : vector<1x1x256xf32> -> vector<1x1x256xf32>
    %cst_7 = arith.constant 4.000000e+00 : f32
    %11 = vector.broadcast %cst_7 : f32 to vector<1x1x256xf32>
    %12 = arith.mulf %11, %10 : vector<1x1x256xf32>
    %13 = vector.broadcast %12 : vector<1x1x256xf32> to vector<1x8x256xf32>
    %14 = arith.mulf %7, %13 : vector<1x8x256xf32>
    %cst_8 = arith.constant dense<0xFF800000> : vector<1x8xf32>
    %15 = vector.multi_reduction <maximumf>, %14, %cst_8 [2] : vector<1x8x256xf32> to vector<1x8xf32>
    %16 = vector.shape_cast %15 : vector<1x8xf32> to vector<1x8x1xf32>
    %17 = vector.broadcast %16 : vector<1x8x1xf32> to vector<1x8x256xf32>
    %18 = arith.subf %14, %17 : vector<1x8x256xf32>
    %19 = math.exp %18 : vector<1x8x256xf32>
    %cst_9 = arith.constant dense<0.000000e+00> : vector<1x8xf32>
    %20 = vector.multi_reduction <add>, %19, %cst_9 [2] : vector<1x8x256xf32> to vector<1x8xf32>
    %21 = vector.shape_cast %20 : vector<1x8xf32> to vector<1x8x1xf32>
    %22 = tpu.reciprocal %21 {approx = true} : vector<1x8x1xf32> -> vector<1x8x1xf32>
    %23 = vector.broadcast %22 : vector<1x8x1xf32> to vector<1x8x256xf32>
    %24 = arith.mulf %19, %23 : vector<1x8x256xf32>
    "tpu.trace_start"() <{level = 10 : i32, message = "bql,bel->bqe"}> : () -> ()
    %cst_10 = arith.constant dense<0.000000e+00> : vector<1x8x32xf32>
    %25 = tpu.matmul %24, %1, %cst_10 {dimension_numbers = #tpu.dot_dimension_numbers<[2], [2], [1], [1], [0, 0, 0, 1, 1, 1], [0], [0]>} : vector<1x8x256xf32>, vector<1x32x256xf32>, vector<1x8x32xf32> -> vector<1x8x32xf32>
    "tpu.trace_stop"() : () -> ()
    %c0_11 = arith.constant 0 : index
    %c0_12 = arith.constant 0 : index
    %c0_13 = arith.constant 0 : index
    %26 = vector.load %arg3[%c0_11, %c0_12, %c0_13] : memref<1x8x32xf32, #tpu.memory_space<vmem>>, vector<1x8x32xf32>
    tpu.vector_store %arg3[%c0_11, %c0_12, %c0_13], %25 {strides = array<i32>} : memref<1x8x32xf32, #tpu.memory_space<vmem>>, vector<1x8x32xf32>,
    %c0_14 = arith.constant 0 : index
    %c0_15 = arith.constant 0 : index
    %c0_16 = arith.constant 0 : index
    %27 = vector.load %arg4[%c0_14, %c0_15, %c0_16] : memref<1x8x256xf32, #tpu.memory_space<vmem>>, vector<1x8x256xf32>
    tpu.vector_store %arg4[%c0_14, %c0_15, %c0_16], %24 {strides = array<i32>} : memref<1x8x256xf32, #tpu.memory_space<vmem>>, vector<1x8x256xf32>,
    return
  }
  func.func @transform_0(%arg0: i32) -> (i32, i32, i32) {
    %c0_i32 = arith.constant 0 : i32
    %c0_i32_0 = arith.constant 0 : i32
    %c0_i32_1 = arith.constant 0 : i32
    return %arg0, %c0_i32, %c0_i32_0 : i32, i32, i32
  }
  func.func @transform_1(%arg0: i32) -> (i32, i32, i32) {
    %c0_i32 = arith.constant 0 : i32
    %c0_i32_0 = arith.constant 0 : i32
    %c0_i32_1 = arith.constant 0 : i32
    return %arg0, %c0_i32, %c0_i32_0 : i32, i32, i32
  }
  func.func @transform_2(%arg0: i32) -> (i32, i32, i32) {
    %c0_i32 = arith.constant 0 : i32
    %c0_i32_0 = arith.constant 0 : i32
    %c0_i32_1 = arith.constant 0 : i32
    return %arg0, %c0_i32, %c0_i32_0 : i32, i32, i32
  }
  func.func @transform_3(%arg0: i32) -> (i32, i32, i32) {
    %c0_i32 = arith.constant 0 : i32
    %c0_i32_0 = arith.constant 0 : i32
    %c0_i32_1 = arith.constant 0 : i32
    return %arg0, %c0_i32, %c0_i32_0 : i32, i32, i32
  }
}

</mosaic_0001>

<llo_original>
// kernel: tpu_custom_call.1
$region0: #{tpu_custom_call.1}
  #allocation0 [shape = 'u32[]', space=smem, size = 0x4, offset = 0x4, fixed_abs, tag = 'smem constant byte address 0x4 - core index']
  #allocation1 [shape = 'u32[144,128]{1,0:T(1,128)}', space=vmem, size = 0x12000, scoped, tag = 'internal scratch']
  %s0 = inlined_call_operand.hbm [shape: f32[2,8,32], index: 0, kind: input, shape index: {}]
  %s1 = inlined_call_operand.hbm [shape: f32[2,32,256], index: 1, kind: input, shape index: {}]
  %s2 = inlined_call_operand.hbm [shape: f32[2,8,32], index: 2, kind: output, shape index: {0}]
  %s3 = inlined_call_operand.hbm [shape: f32[2,8,256], index: 3, kind: output, shape index: {1}]
  %4 = xla_tuple %s2, %s3
  %s5 = sld [smem:[#allocation0]]
  $region57: #{tpu_custom_call.1} parent=0
    _
  %s7 = ssub.s32 1, %s5
  %s8 = scalar_select 0, %s7, %s5
  $region1: #{tpu_custom_call.1} parent=0
    #allocation2 [shape = 'u8[8192]{0}', space=vmem, size = 0x2000, scoped, tag = 'input window, operand 0']
    #allocation3 [shape = 's32[2]{0}', space=sflag, size = 0x8, scoped, tag = 'scoped memory for tpu_custom_call.1']
    #allocation4 [shape = 's32[2]{0}', space=sflag, size = 0x8, scoped, tag = 'scoped memory for tpu_custom_call.1']
    #allocation5 [shape = 'u8[65536]{0}', space=vmem, size = 0x10000, scoped, tag = 'input window, operand 1']
    #allocation6 [shape = 's32[2]{0}', space=sflag, size = 0x8, scoped, tag = 'scoped memory for tpu_custom_call.1']
    #allocation7 [shape = 'u8[8192]{0}', space=vmem, size = 0x2000, scoped, tag = 'output window, operand 0']
    #allocation8 [shape = 'u8[16384]{0}', space=vmem, size = 0x4000, scoped, tag = 'output window, operand 1']
    #allocation9 [shape = 's32[2]{0}', space=sflag, size = 0x8, scoped, tag = 'scoped memory for tpu_custom_call.1']
    %9 = vsyncpa [#allocation3], 0
    %s10 = scalar_lea.sflag [#allocation3], 1
    %11 = vsyncpa %s10, 0
    %12 = vsyncpa [#allocation6], 0
    %s13 = scalar_lea.sflag [#allocation6], 1
    %14 = vsyncpa %s13, 0
    %15 = vsyncpa [#allocation4], 0
    %s16 = scalar_lea.sflag [#allocation4], 1
    %17 = vsyncpa %s16, 0
    %18 = vsyncpa [#allocation9], 0
    %s19 = scalar_lea.sflag [#allocation9], 1
    %20 = vsyncpa %s19, 0
    loop: start=0, step=1, limit=4
    $region2: #{tpu_custom_call.1} parent=1 // loop_pre_header
      _
    $region3: #{tpu_custom_call.1} parent=1 // loop_header
      %s22 = sphi 0, %s26
      %p23 = scmp.ge.s32.totalorder %s22, 4
      %s32 = sphi 0, %s34
      %s35 = sphi 0, %s32
      %s36 = sphi 0, %s35
      %s52 = sphi 0, %s36
      %s58 = sphi 0, %s60
      %s61 = sphi 0, %s58
      %s62 = sphi 0, %s61
      %s78 = sphi 0, %s62
      %s84 = sphi 0, %s86
      %s87 = sphi 0, %s84
      %s88 = sphi 0, %s87
      %s104 = sphi 0, %s88
      %s110 = sphi 0, %s112
      %s113 = sphi 0, %s110
      %s114 = sphi 0, %s113
      %s130 = sphi 0, %s114
    $region4: #{tpu_custom_call.1} parent=1 // loop_header_branch
      %25 = sbr.rel (%p23) target = $region8
    $region5: #{tpu_custom_call.1} parent=1 // loop_body
      %s27 = ssub.s32 %s22, 1
      %s28 = ssub.s32 %s22, 2
      %s29 = sadd.s32 %s22, 1
      %s30 = ssub.s32 %s22, %s29
      %p31 = scmp.eq.s32.totalorder %s30, 0
      %s33 = sadd.s32 %s32, 1
      %s34 = scalar_select %p31, %s32, %s33
      %p37 = pneg %p31
      %p38 = scmp.eq.s32.totalorder %s22, 1
      %p39 = por %p37, %p38
      %p40 = scmp.ne.s32.totalorder %s32, %s35
      %p41 = scmp.eq.s32.totalorder %s22, 0
      %p42 = por %p40, %p41
      %p43 = scmp.ne.s32.totalorder %s32, %s35
      %p44 = scmp.eq.s32.totalorder %s27, 1
      %p45 = por %p43, %p44
      %p46 = scmp.ne.s32.totalorder %s35, %s36
      %p47 = scmp.eq.s32.totalorder %s27, 0
      %p48 = por %p46, %p47
      %p49 = scmp.ne.s32.totalorder %s35, %s36
      %p50 = scmp.eq.s32.totalorder %s28, 1
      %p51 = por %p49, %p50
      %p53 = scmp.ne.s32.totalorder %s36, %s52
      %p54 = scmp.eq.s32.totalorder %s28, 0
      %p55 = por %p53, %p54
      %s56 = ssub.s32 %s22, %s29
      %p57 = scmp.eq.s32.totalorder %s56, 0
      %s59 = sadd.s32 %s58, 1
      %s60 = scalar_select %p57, %s58, %s59
      %p63 = pneg %p57
      %p64 = scmp.eq.s32.totalorder %s22, 1
      %p65 = por %p63, %p64
      %p66 = scmp.ne.s32.totalorder %s58, %s61
      %p67 = scmp.eq.s32.totalorder %s22, 0
      %p68 = por %p66, %p67
      %p69 = scmp.ne.s32.totalorder %s58, %s61
      %p70 = scmp.eq.s32.totalorder %s27, 1
      %p71 = por %p69, %p70
      %p72 = scmp.ne.s32.totalorder %s61, %s62
      %p73 = scmp.eq.s32.totalorder %s27, 0
      %p74 = por %p72, %p73
      %p75 = scmp.ne.s32.totalorder %s61, %s62
      %p76 = scmp.eq.s32.totalorder %s28, 1
      %p77 = por %p75, %p76
      %p79 = scmp.ne.s32.totalorder %s62, %s78
      %p80 = scmp.eq.s32.totalorder %s28, 0
      %p81 = por %p79, %p80
      %s82 = ssub.s32 %s22, %s29
      %p83 = scmp.eq.s32.totalorder %s82, 0
      %s85 = sadd.s32 %s84, 1
      %s86 = scalar_select %p83, %s84, %s85
      %p89 = pneg %p83
      %p90 = scmp.eq.s32.totalorder %s22, 1
      %p91 = por %p89, %p90
      %p92 = scmp.ne.s32.totalorder %s84, %s87
      %p93 = scmp.eq.s32.totalorder %s22, 0
      %p94 = por %p92, %p93
      %p95 = scmp.ne.s32.totalorder %s84, %s87
      %p96 = scmp.eq.s32.totalorder %s27, 1
      %p97 = por %p95, %p96
      %p98 = scmp.ne.s32.totalorder %s87, %s88
      %p99 = scmp.eq.s32.totalorder %s27, 0
      %p100 = por %p98, %p99
      %p101 = scmp.ne.s32.totalorder %s87, %s88
      %p102 = scmp.eq.s32.totalorder %s28, 1
      %p103 = por %p101, %p102
      %p105 = scmp.ne.s32.totalorder %s88, %s104
      %p106 = scmp.eq.s32.totalorder %s28, 0
      %p107 = por %p105, %p106
      %s108 = ssub.s32 %s22, %s29
      %p109 = scmp.eq.s32.totalorder %s108, 0
      %s111 = sadd.s32 %s110, 1
      %s112 = scalar_select %p109, %s110, %s111
      %p115 = pneg %p109
      %p116 = scmp.eq.s32.totalorder %s22, 1
      %p117 = por %p115, %p116
      %p118 = scmp.ne.s32.totalorder %s110, %s113
      %p119 = scmp.eq.s32.totalorder %s22, 0
      %p120 = por %p118, %p119
      %p121 = scmp.ne.s32.totalorder %s110, %s113
      %p122 = scmp.eq.s32.totalorder %s27, 1
      %p123 = por %p121, %p122
      %p124 = scmp.ne.s32.totalorder %s113, %s114
      %p125 = scmp.eq.s32.totalorder %s27, 0
      %p126 = por %p124, %p125
      %p127 = scmp.ne.s32.totalorder %s113, %s114
      %p128 = scmp.eq.s32.totalorder %s28, 1
      %p129 = por %p127, %p128
      %p131 = scmp.ne.s32.totalorder %s114, %s130
      %p132 = scmp.eq.s32.totalorder %s28, 0
      %p133 = por %p131, %p132
      %p134 = scmp.le.s32.totalorder 1, %s22
      %p135 = scmp.lt.s32.totalorder %s22, 3
      %p136 = pnand %p134, %p135
      %p137 = pneg %p136
      // Predicated region
      $region9: #{tpu_custom_call.1} parent=5 // pred_check
        _
      $region10: #{tpu_custom_call.1} parent=5 // pred_check_branch
        %139 = sbr.rel (%p136) target = $region12
      $region11: #{tpu_custom_call.1} parent=5 // pred_region
        %s140 = ssub.s32 %s22, 1
      $region12: #{tpu_custom_call.1} parent=5 // pred_fallthru
        _
      %p141 = scmp.lt.s32.totalorder %s22, 2
      // Predicated region
      $region13: #{tpu_custom_call.1} parent=5 // pred_check
        %p142 = pneg %p141
      $region14: #{tpu_custom_call.1} parent=5 // pred_check_branch
        %144 = sbr.rel (%p142) target = $region16
      $region15: #{tpu_custom_call.1} parent=5 // pred_region
        // Predicated region
        $region17: #{tpu_custom_call.1} parent=15 // pred_check
          %p145 = pneg %p42
        $region18: #{tpu_custom_call.1} parent=15 // pred_check_branch
          %147 = sbr.rel (%p145) target = $region20
        $region19: #{tpu_custom_call.1} parent=15 // pred_region
          %s148 = sand.u32 %s32, 1
          %s149 = scalar_lea.sflag [#allocation3], %s148
          %s150 = sand.u32 %s32, 1
          %s151 = smul.addr %s150, 8
          %s152 = scalar_lea.vmem [#allocation2], %s151
          %s154 = ssub.s32 128, 128
          %155 = vsyncadd %s149, %s154
          %s156 = smul.addr %s22, 128
          %s157 = scalar_lea.hbm %s0, %s156
          %s159 = sshll.u32 %s152, 4
          %s160 = int_to_ptr.vmem [resolvable:$true] %s159
          %162 = dma.hbm_to_vmem [thread:$0]  %s157, 128, %s160, %s149
        $region20: #{tpu_custom_call.1} parent=15 // pred_fallthru
          _
        // Predicated region
        $region21: #{tpu_custom_call.1} parent=15 // pred_check
          %p163 = pneg %p68
        $region22: #{tpu_custom_call.1} parent=15 // pred_check_branch
          %165 = sbr.rel (%p163) target = $region24
        $region23: #{tpu_custom_call.1} parent=15 // pred_region
          %s166 = sand.u32 %s58, 1
          %s167 = scalar_lea.sflag [#allocation6], %s166
          %s168 = sand.u32 %s58, 1
          %s169 = smul.addr %s168, 64
          %s170 = scalar_lea.vmem [#allocation5], %s169
          %s172 = ssub.s32 1024, 1024
          %173 = vsyncadd %s167, %s172
          %s174 = smul.addr %s22, 8
          %s175 = smul.addr %s174, 128
          %s176 = scalar_lea.hbm %s1, %s175
          %s177 = sshll.u32 %s170, 4
          %s178 = int_to_ptr.vmem [resolvable:$true] %s177
          %183 = dma.hbm_to_vmem [thread:$0]  %s176, 1024, %s178, %s167, 256, 256, 16
        $region24: #{tpu_custom_call.1} parent=15 // pred_fallthru
          _
      $region16: #{tpu_custom_call.1} parent=5 // pred_fallthru
        _
      %p184 = scmp.le.s32.totalorder 1, %s22
      %p185 = scmp.lt.s32.totalorder %s22, 3
      %p186 = pnand %p184, %p185
      %p187 = pneg %p186
      // Predicated region
      $region25: #{tpu_custom_call.1} parent=5 // pred_check
        _
      $region26: #{tpu_custom_call.1} parent=5 // pred_check_branch
        %189 = sbr.rel (%p186) target = $region28
      $region27: #{tpu_custom_call.1} parent=5 // pred_region
        %s190 = ssub.s32 %s22, 1
        %s191 = sand.u32 %s35, 1
        %s192 = scalar_lea.sflag [#allocation3], %s191
        %s193 = sand.u32 %s35, 1
        %s194 = smul.addr %s193, 8
        %s195 = scalar_lea.vmem [#allocation2], %s194
        // Predicated region
        $region29: #{tpu_custom_call.1} parent=27 // pred_check
          %p196 = pneg %p48
        $region30: #{tpu_custom_call.1} parent=27 // pred_check_branch
          %198 = sbr.rel (%p196) target = $region32
        $region31: #{tpu_custom_call.1} parent=27 // pred_region
          %199 = dma.done %s192, 128
        $region32: #{tpu_custom_call.1} parent=27 // pred_fallthru
          _
        %s200 = sand.u32 %s61, 1
        %s201 = scalar_lea.sflag [#allocation6], %s200
        %s202 = sand.u32 %s61, 1
        %s203 = smul.addr %s202, 64
        %s204 = scalar_lea.vmem [#allocation5], %s203
        // Predicated region
        $region33: #{tpu_custom_call.1} parent=27 // pred_check
          %p205 = pneg %p74
        $region34: #{tpu_custom_call.1} parent=27 // pred_check_branch
          %207 = sbr.rel (%p205) target = $region36
        $region35: #{tpu_custom_call.1} parent=27 // pred_region
          %208 = dma.done %s201, 1024
        $region36: #{tpu_custom_call.1} parent=27 // pred_fallthru
          _
        %s209 = sand.u32 %s35, 1
        %s210 = scalar_lea.sflag [#allocation3], %s209
        %s211 = sand.u32 %s35, 1
        %s212 = smul.addr %s211, 8
        %s213 = scalar_lea.vmem [#allocation2], %s212
        %p214 = pneg %p48
        %p215 = pneg %p45
        %s216 = sand.u32 %s61, 1
        %s217 = scalar_lea.sflag [#allocation6], %s216
        %s218 = sand.u32 %s61, 1
        %s219 = smul.addr %s218, 64
        %s220 = scalar_lea.vmem [#allocation5], %s219
        %p221 = pneg %p74
        %p222 = pneg %p71
        %p223 = pneg %p100
        %p224 = pneg %p97
        %s225 = sand.u32 %s87, 1
        %s226 = scalar_lea.sflag [#allocation4], %s225
        %s227 = sand.u32 %s87, 1
        %s228 = smul.addr %s227, 8
        %s229 = scalar_lea.vmem [#allocation7], %s228
        %p230 = pneg %p126
        %p231 = pneg %p123
        %s232 = sand.u32 %s113, 1
        %s233 = scalar_lea.sflag [#allocation9], %s232
        %s234 = sand.u32 %s113, 1
        %s235 = smul.addr %s234, 16
        %s236 = scalar_lea.vmem [#allocation8], %s235
        %v237 = vld [vmem:[%s195] sm:$0xff]
        %v238 = vld [vmem:[%s204] sm:$0xff]
        %v239 = vld [vmem:[%s204 + $0x8] sm:$0xff]
        %v240 = vld [vmem:[%s204 + $0x10] sm:$0xff]
        %v241 = vld [vmem:[%s204 + $0x18] sm:$0xff]
        %v242 = vld [vmem:[%s204 + $0x20] sm:$0xff]
        %v243 = vld [vmem:[%s204 + $0x28] sm:$0xff]
        %v244 = vld [vmem:[%s204 + $0x30] sm:$0xff]
        %v245 = vld [vmem:[%s204 + $0x38] sm:$0xff]
        %vm246 = vcmask 261120
        %v248 = vsel %vm246, %v237, 0
        %250 = vmatprep.subr.mxu0 0.0
        %251 = vmatpush1.msra.mxu0 0.0
        %252 = vmatprep.subr.mxu0 0.0
        %253 = vmatpush1.msra.mxu0 0.0
        %254 = vmatprep.subr.mxu0 0.0
        %255 = vmatpush1.msra.mxu0 0.0
        %256 = vmatprep.subr.mxu0 0.0
        %257 = vmatpush1.msra.mxu0 0.0
        %258 = vmatprep.subr.mxu0 0.0
        %259 = vmatpush1.msra.mxu0 0.0
        %260 = vmatprep.subr.mxu0 0.0
        %261 = vmatpush1.msra.mxu0 0.0
        %262 = vmatprep.subr.mxu0 0.0
        %263 = vmatpush1.msra.mxu0 0.0
        %264 = vmatprep.subr.mxu0 0.0
        %265 = vmatpush1.msra.mxu0 0.0
        %266 = vmatprep.subr.mxu0 0.0
        %267 = vmatpush1.msra.mxu0 0.0
        %268 = vmatprep.subr.mxu0 0.0
        %269 = vmatpush1.msra.mxu0 0.0
        %270 = vmatprep.subr.mxu0 0.0
        %271 = vmatpush1.msra.mxu0 0.0
        %272 = vmatprep.subr.mxu0 0.0
        %273 = vmatpush1.msra.mxu0 0.0
        %274 = vmatprep.subr.mxu0 %v245
        %275 = vmatpush1.msra.mxu0 %v244
        %276 = vmatprep.subr.mxu0 %v243
        %277 = vmatpush1.msra.mxu0 %v242
        %278 = vmatprep.subr.mxu0 %v241
        %279 = vmatpush1.msra.mxu0 %v240
        %280 = vmatprep.subr.mxu0 %v239
        %281 = vmatpush1.msra.mxu0 %v238
        %282 = vmatprep.subr.mxu0 0.0
        %283 = vmatpush2.msra.mxu0 0.0
        %284 = vmatprep.subr.mxu0 0.0
        %285 = vmatpush2.msra.mxu0 0.0
        %286 = vmatprep.subr.mxu0 0.0
        %287 = vmatpush2.msra.mxu0 0.0
        %288 = vmatprep.subr.mxu0 0.0
        %289 = vmatpush2.msra.mxu0 0.0
        %290 = vmatprep.subr.mxu0 0.0
        %291 = vmatpush2.msra.mxu0 0.0
        %292 = vmatprep.subr.mxu0 0.0
        %293 = vmatpush2.msra.mxu0 0.0
        %294 = vmatprep.subr.mxu0 0.0
        %295 = vmatpush2.msra.mxu0 0.0
        %296 = vmatprep.subr.mxu0 0.0
        %297 = vmatpush2.msra.mxu0 0.0
        %298 = vmatprep.subr.mxu0 0.0
        %299 = vmatpush2.msra.mxu0 0.0
        %300 = vmatprep.subr.mxu0 0.0
        %301 = vmatpush2.msra.mxu0 0.0
        %302 = vmatprep.subr.mxu0 0.0
        %303 = vmatpush2.msra.mxu0 0.0
        %304 = vmatprep.subr.mxu0 0.0
        %305 = vmatpush2.msra.mxu0 0.0
        %306 = vmatprep.subr.mxu0 0.0
        %307 = vmatpush2.msra.mxu0 0.0
        %308 = vmatprep.subr.mxu0 0.0
        %309 = vmatpush2.msra.mxu0 0.0
        %310 = vmatprep.subr.mxu0 0.0
        %311 = vmatpush2.msra.mxu0 0.0
        %312 = vmatprep.subr.mxu0 0.0
        %313 = vmatpush2.msra.mxu0 0.0
        %314 = vmatprep.mubr.f32.mxu0 0.0
        %315 = vmatmul.mubr.f32.gmra.mxu0 %v248
        %v316 = vpop.f32.mrf.mxu0
        %v317 = vadd.f32 0.0, %v316
        %v318 = vpop.f32.mrf.mxu0
        %v319 = vadd.f32 0.0, %v318
        %320 = vdwg.mxu0
        %v321 = vrot.slane %v317, 4
        %v322 = vmax.f32 %v317, %v321
        %v323 = vrot.slane %v322, 2
        %v324 = vmax.f32 %v322, %v323
        %v325 = vrot.slane %v324, 1
        %v326 = vmax.f32 %v324, %v325
        %v327 = vrot.slane %v319, 4
        %v328 = vmax.f32 %v319, %v327
        %v329 = vrot.slane %v328, 2
        %v330 = vmax.f32 %v328, %v329
        %v331 = vrot.slane %v330, 1
        %v332 = vmax.f32 %v330, %v331
        %v333 = vsub.f32 %v317, %v326
        %v334 = vsub.f32 %v319, %v332
        %v335 = vmul.f32 %v333, 1.442695
        %v336 = vpow.pop %v335
        %v337 = vmul.f32 %v334, 1.442695
        %v338 = vpow.pop %v337
        %v339 = vrot.slane %v336, 4
        %v340 = vadd.f32 %v336, %v339
        %v341 = vrot.slane %v340, 2
        %v342 = vadd.f32 %v340, %v341
        %v343 = vrot.slane %v342, 1
        %v344 = vadd.f32 %v342, %v343
        %v345 = vrot.slane %v338, 4
        %v346 = vadd.f32 %v338, %v345
        %v347 = vrot.slane %v346, 2
        %v348 = vadd.f32 %v346, %v347
        %v349 = vrot.slane %v348, 1
        %v350 = vadd.f32 %v348, %v349
        %v351 = vrcp.pop %v344
        %v352 = vrcp.pop %v350
        %v353 = vmul.f32 %v351, 4.0
        %v354 = vmul.f32 %v352, 4.0
        %v355 = vmul.f32 %v336, %v353
        %v356 = vmul.f32 %v338, %v354
        %v357 = vmax.f32 %v355, %v356
        %358 = vmax.xlane.f32.xlu0 %v357
        %v359 = vpop.xlane.xlu0 %358
        %v360 = vsub.f32 %v355, %v359
        %v361 = vsub.f32 %v356, %v359
        %v362 = vmul.f32 %v360, 1.442695
        %v363 = vpow.pop %v362
        %v364 = vmul.f32 %v361, 1.442695
        %v365 = vpow.pop %v364
        %v366 = vadd.f32 %v363, %v365
        %367 = vadd.xlane.f32.xlu0 %v366
        %v368 = vpop.xlane.xlu0 %367
        %v369 = vrcp.pop %v368
        %v370 = vmul.f32 %v363, %v369
        %v371 = vmul.f32 %v365, %v369
        %372 = vmatprep.subr.mxu0 0.0
        %373 = vmatpush1.xpose.msra.mxu0 0.0
        %374 = vmatprep.subr.mxu0 0.0
        %375 = vmatpush1.xpose.msra.mxu0 0.0
        %376 = vmatprep.subr.mxu0 0.0
        %377 = vmatpush1.xpose.msra.mxu0 0.0
        %378 = vmatprep.subr.mxu0 0.0
        %379 = vmatpush1.xpose.msra.mxu0 0.0
        %380 = vmatprep.subr.mxu0 0.0
        %381 = vmatpush1.xpose.msra.mxu0 0.0
        %382 = vmatprep.subr.mxu0 0.0
        %383 = vmatpush1.xpose.msra.mxu0 0.0
        %384 = vmatprep.subr.mxu0 0.0
        %385 = vmatpush1.xpose.msra.mxu0 0.0
        %386 = vmatprep.subr.mxu0 0.0
        %387 = vmatpush1.xpose.msra.mxu0 0.0
        %388 = vmatprep.subr.mxu0 0.0
        %389 = vmatpush1.xpose.msra.mxu0 0.0
        %390 = vmatprep.subr.mxu0 0.0
        %391 = vmatpush1.xpose.msra.mxu0 0.0
        %392 = vmatprep.subr.mxu0 0.0
        %393 = vmatpush1.xpose.msra.mxu0 0.0
        %394 = vmatprep.subr.mxu0 0.0
        %395 = vmatpush1.xpose.msra.mxu0 0.0
        %396 = vmatprep.subr.mxu0 %v245
        %397 = vmatpush1.xpose.msra.mxu0 %v244
        %398 = vmatprep.subr.mxu0 %v243
        %399 = vmatpush1.xpose.msra.mxu0 %v242
        %400 = vmatprep.subr.mxu0 %v241
        %401 = vmatpush1.xpose.msra.mxu0 %v240
        %402 = vmatprep.subr.mxu0 %v239
        %403 = vmatpush1.xpose.msra.mxu0 %v238
        %404 = vmatprep.subr.mxu0 0.0
        %405 = vmatpush2.xpose.msra.mxu0 0.0
        %406 = vmatprep.subr.mxu0 0.0
        %407 = vmatpush2.xpose.msra.mxu0 0.0
        %408 = vmatprep.subr.mxu0 0.0
        %409 = vmatpush2.xpose.msra.mxu0 0.0
        %410 = vmatprep.subr.mxu0 0.0
        %411 = vmatpush2.xpose.msra.mxu0 0.0
        %412 = vmatprep.subr.mxu0 0.0
        %413 = vmatpush2.xpose.msra.mxu0 0.0
        %414 = vmatprep.subr.mxu0 0.0
        %415 = vmatpush2.xpose.msra.mxu0 0.0
        %416 = vmatprep.subr.mxu0 0.0
        %417 = vmatpush2.xpose.msra.mxu0 0.0
        %418 = vmatprep.subr.mxu0 0.0
        %419 = vmatpush2.xpose.msra.mxu0 0.0
        %420 = vmatprep.subr.mxu0 0.0
        %421 = vmatpush2.xpose.msra.mxu0 0.0
        %422 = vmatprep.subr.mxu0 0.0
        %423 = vmatpush2.xpose.msra.mxu0 0.0
        %424 = vmatprep.subr.mxu0 0.0
        %425 = vmatpush2.xpose.msra.mxu0 0.0
        %426 = vmatprep.subr.mxu0 0.0
        %427 = vmatpush2.xpose.msra.mxu0 0.0
        %428 = vmatprep.subr.mxu0 0.0
        %429 = vmatpush2.xpose.msra.mxu0 0.0
        %430 = vmatprep.subr.mxu0 0.0
        %431 = vmatpush2.xpose.msra.mxu0 0.0
        %432 = vmatprep.subr.mxu0 0.0
        %433 = vmatpush2.xpose.msra.mxu0 0.0
        %434 = vmatprep.subr.mxu0 0.0
        %435 = vmatpush2.xpose.msra.mxu0 0.0
        %436 = vmatprep.mubr.f32.mxu0 %v371
        %437 = vmatmul.mubr.f32.gmra.mxu0 %v370
        %v438 = vpop.f32.mrf.mxu0
        %v439 = vadd.f32 0.0, %v438
        %v440 = vpop.f32.mrf.mxu0
        %441 = vdwg.mxu0
        %442 = vst.msk [vmem:[%s229] sm:$0xff] %vm246, %v439
        %443 = vst [vmem:[%s236] sm:$0xff] %v370
        %444 = vst [vmem:[%s236 + $0x8] sm:$0xff] %v371
        %s445 = sand.u32 %s87, 1
        %s446 = scalar_lea.sflag [#allocation4], %s445
        %s447 = sand.u32 %s87, 1
        %s448 = smul.addr %s447, 8
        %s449 = scalar_lea.vmem [#allocation7], %s448
        %s450 = sand.u32 %s113, 1
        %s451 = scalar_lea.sflag [#allocation9], %s450
        %s452 = sand.u32 %s113, 1
        %s453 = smul.addr %s452, 16
        %s454 = scalar_lea.vmem [#allocation8], %s453
        // Predicated region
        $region37: #{tpu_custom_call.1} parent=27 // pred_check
          %p455 = pneg %p97
        $region38: #{tpu_custom_call.1} parent=27 // pred_check_branch
          %457 = sbr.rel (%p455) target = $region40
        $region39: #{tpu_custom_call.1} parent=27 // pred_region
          %s459 = ssub.s32 128, 128
          %460 = vsyncadd %s446, %s459
          %s461 = smul.addr %s27, 128
          %s462 = scalar_lea.hbm %s2, %s461
          %s464 = sshll.u32 %s449, 4
          %s465 = int_to_ptr.vmem [resolvable:$true] %s464
          %467 = dma.vmem_to_hbm [thread:$0]  %s465, 128, %s462, %s446
        $region40: #{tpu_custom_call.1} parent=27 // pred_fallthru
          _
        // Predicated region
        $region41: #{tpu_custom_call.1} parent=27 // pred_check
          %p468 = pneg %p123
        $region42: #{tpu_custom_call.1} parent=27 // pred_check_branch
          %470 = sbr.rel (%p468) target = $region44
        $region43: #{tpu_custom_call.1} parent=27 // pred_region
          %s472 = ssub.s32 256, 256
          %473 = vsyncadd %s451, %s472
          %s474 = smul.addr %s27, 2
          %s475 = smul.addr %s474, 128
          %s476 = scalar_lea.hbm %s3, %s475
          %s478 = sshll.u32 %s454, 4
          %s479 = int_to_ptr.vmem [resolvable:$true] %s478
          %481 = dma.vmem_to_hbm [thread:$0]  %s479, 256, %s476, %s451
        $region44: #{tpu_custom_call.1} parent=27 // pred_fallthru
          _
      $region28: #{tpu_custom_call.1} parent=5 // pred_fallthru
        _
      %p482 = scmp.le.s32.totalorder 2, %s22
      // Predicated region
      $region45: #{tpu_custom_call.1} parent=5 // pred_check
        %p483 = pneg %p482
      $region46: #{tpu_custom_call.1} parent=5 // pred_check_branch
        %485 = sbr.rel (%p483) target = $region48
      $region47: #{tpu_custom_call.1} parent=5 // pred_region
        %s486 = ssub.s32 %s22, 2
        // Predicated region
        $region49: #{tpu_custom_call.1} parent=47 // pred_check
          %p487 = pneg %p103
        $region50: #{tpu_custom_call.1} parent=47 // pred_check_branch
          %489 = sbr.rel (%p487) target = $region52
        $region51: #{tpu_custom_call.1} parent=47 // pred_region
          %s490 = sand.u32 %s88, 1
          %s491 = scalar_lea.sflag [#allocation4], %s490
          %s492 = sand.u32 %s88, 1
          %s493 = smul.addr %s492, 8
          %s494 = scalar_lea.vmem [#allocation7], %s493
          %495 = dma.done %s491, 128
        $region52: #{tpu_custom_call.1} parent=47 // pred_fallthru
          _
        // Predicated region
        $region53: #{tpu_custom_call.1} parent=47 // pred_check
          %p496 = pneg %p129
        $region54: #{tpu_custom_call.1} parent=47 // pred_check_branch
          %498 = sbr.rel (%p496) target = $region56
        $region55: #{tpu_custom_call.1} parent=47 // pred_region
          %s499 = sand.u32 %s114, 1
          %s500 = scalar_lea.sflag [#allocation9], %s499
          %s501 = sand.u32 %s114, 1
          %s502 = smul.addr %s501, 16
          %s503 = scalar_lea.vmem [#allocation8], %s502
          %504 = dma.done %s500, 256
        $region56: #{tpu_custom_call.1} parent=47 // pred_fallthru
          _
      $region48: #{tpu_custom_call.1} parent=5 // pred_fallthru
        _
    $region6: #{tpu_custom_call.1} parent=1 // loop_footer
      %s26 = sadd.s32 1, %s22
    $region7: #{tpu_custom_call.1} parent=1 // loop_footer_branch
      %21 = sbr.rel target = $region3
    $region8: #{tpu_custom_call.1} parent=1 // loop_exit
      _
    %505 = vsyncpa [#allocation3], 1
    %s506 = scalar_lea.sflag [#allocation3], 1
    %507 = vsyncpa %s506, 1
    %508 = vsyncpa [#allocation6], 1
    %s509 = scalar_lea.sflag [#allocation6], 1
    %510 = vsyncpa %s509, 1
    %511 = vsyncpa [#allocation4], 1
    %s512 = scalar_lea.sflag [#allocation4], 1
    %513 = vsyncpa %s512, 1
    %514 = vsyncpa [#allocation9], 1
    %s515 = scalar_lea.sflag [#allocation9], 1
    %516 = vsyncpa %s515, 1

</llo_original>
